<compile_context>
chip_gen: v6e
topology: v6e:2x2x1
jax: 0.10.0
libtpu: 0.0.40
codegen_flags: <defaults>
</compile_context>

<pallas_src>
import jax
import jax.numpy as jnp
from jax.experimental import pallas as pl
from jax.experimental.pallas import tpu as pltpu

# cfg constants (synthetic, deterministic)
FOCAL_LOSS_ALPHA = 0.25
FOCAL_LOSS_GAMMA = 2.0

LANES = 128
SUBLANES = 8


def _round_up(x, m):
    return ((x + m - 1) // m) * m


def _pow_gamma(x, gamma):
    # Specialize small integer gammas to VPU multiplies (EUP-free, NaN-safe).
    if float(gamma).is_integer() and 1 <= int(gamma) <= 4:
        r = x
        for _ in range(int(gamma) - 1):
            r = r * x
        return r
    return jnp.power(x, gamma)


def _focal_reduce_kernel(inp_ref, tgt_ref, fw_out_ref, bce_out_ref):
    i = pl.program_id(1)  # inner reduction axis (last grid axis)

    @pl.when(i == 0)
    def _():
        fw_out_ref[...] = jnp.zeros_like(fw_out_ref)
        bce_out_ref[...] = jnp.zeros_like(bce_out_ref)

    p = inp_ref[...].astype(jnp.float32)
    t = tgt_ref[...].astype(jnp.float32)

    is_pos = t == 1.0
    alpha_factor = jnp.where(is_pos, FOCAL_LOSS_ALPHA, 1.0 - FOCAL_LOSS_ALPHA)
    pt = jnp.where(is_pos, 1.0 - p, p)
    focal_weight = alpha_factor * _pow_gamma(pt, FOCAL_LOSS_GAMMA)

    # Per-element BCE; PyTorch clamps the logs at -100.  Note the general
    # two-term form is kept so soft/fractional targets stay exact (a single-log
    # variant would halve EUP work but is only valid for strictly-binary t).
    # Zero padding (p == 0, t == 0) contributes exactly 0 to both sums.
    log_p = jnp.maximum(jnp.log(p), -100.0)
    log_1mp = jnp.maximum(jnp.log(1.0 - p), -100.0)
    bce = -(t * log_p + (1.0 - t) * log_1mp)

    # Fold the (TR, 128) tile into (8, 128) with elementwise vreg adds and
    # accumulate into the lane-dense resident output block (pure VPU work).
    tr = focal_weight.shape[0]
    fw_part = jnp.sum(focal_weight.reshape(tr // SUBLANES, SUBLANES, LANES), axis=0)
    bce_part = jnp.sum(bce.reshape(tr // SUBLANES, SUBLANES, LANES), axis=0)
    fw_out_ref[...] += fw_part[None]
    bce_out_ref[...] += bce_part[None]


def focal_loss(inputs, targets, *, tile_rows=2048, num_shards=2):
    """inputs, targets: same-shape float arrays; inputs are probabilities."""
    assert inputs.shape == targets.shape
    n_elems = inputs.size
    rows = -(-n_elems // LANES)

    # Clamp the tile so tiny inputs aren't padded out to a full 2048-row tile;
    # keep it a multiple of 8 sublanes.
    tr = min(tile_rows, _round_up(max(-(-rows // num_shards), SUBLANES), SUBLANES))
    tr = _round_up(tr, SUBLANES)

    padded_rows = _round_up(rows, tr * num_shards)
    padded_n = padded_rows * LANES
    steps = padded_rows // (tr * num_shards)

    x = inputs.reshape(-1)
    t = targets.reshape(-1)
    if padded_n != n_elems:
        x = jnp.pad(x, (0, padded_n - n_elems))
        t = jnp.pad(t, (0, padded_n - n_elems))
    x2d = x.reshape(padded_rows, LANES)
    t2d = t.reshape(padded_rows, LANES)

    fw_part, bce_part = pl.pallas_call(
        _focal_reduce_kernel,
        out_shape=(
            jax.ShapeDtypeStruct((num_shards, SUBLANES, LANES), jnp.float32),
            jax.ShapeDtypeStruct((num_shards, SUBLANES, LANES), jnp.float32),
        ),
        grid_spec=pltpu.PrefetchScalarGridSpec(
            num_scalar_prefetch=0,
            grid=(num_shards, steps),
            in_specs=[
                pl.BlockSpec((tr, LANES), lambda c, i: (c * steps + i, 0)),
                pl.BlockSpec((tr, LANES), lambda c, i: (c * steps + i, 0)),
            ],
            out_specs=[
                pl.BlockSpec((1, SUBLANES, LANES), lambda c, i: (c, 0, 0)),
                pl.BlockSpec((1, SUBLANES, LANES), lambda c, i: (c, 0, 0)),
            ],
        ),
        compiler_params=pltpu.CompilerParams(
            dimension_semantics=("parallel", "arbitrary"),
        ),
    )(x2d, t2d)

    # F.binary_cross_entropy (reduction='mean') gives a scalar, so
    # (focal_weight * bce).sum() == sum(focal_weight) * mean(bce).
    sum_fw = jnp.sum(fw_part)
    mean_bce = jnp.sum(bce_part) / jnp.float32(n_elems)
    return sum_fw * mean_bce


def _reference(inputs, targets):
    p = inputs.astype(jnp.float32)
    t = targets.astype(jnp.float32)
    is_pos = t == 1.0
    alpha_factor = jnp.where(is_pos, FOCAL_LOSS_ALPHA, 1.0 - FOCAL_LOSS_ALPHA)
    fw = alpha_factor * jnp.power(jnp.where(is_pos, 1.0 - p, p), FOCAL_LOSS_GAMMA)
    bce = jnp.mean(-(t * jnp.maximum(jnp.log(p), -100.0)
                     + (1.0 - t) * jnp.maximum(jnp.log(1.0 - p), -100.0)))
    return jnp.sum(fw * bce)


if __name__ == "__main__":
    key = jax.random.PRNGKey(0)
    k1, k2 = jax.random.split(key)

    B, C, H, W = 2, 4, 16, 16  # NCHW
    # inputs are probabilities (as expected by binary_cross_entropy)
    inputs = jax.random.uniform(k1, (B, C, H, W), jnp.float32,
                                minval=0.02, maxval=0.98)
    targets = jax.random.bernoulli(k2, 0.3, (B, C, H, W)).astype(jnp.float32)

    loss = jax.block_until_ready(focal_loss(inputs, targets))
    ref = jax.block_until_ready(_reference(inputs, targets))

    assert jnp.allclose(loss, ref, rtol=1e-5, atol=1e-5), (loss, ref)
    print("KERNEL_OK")
</pallas_src>

<mosaic_0001>
module attributes {stable_mosaic.version = 11 : i64} {
  func.func @_focal_reduce_kernel(%arg0: i32, %arg1: i32, %arg2: memref<8x128xf32, #tpu.memory_space<vmem>>, %arg3: memref<8x128xf32, #tpu.memory_space<vmem>>, %arg4: memref<1x8x128xf32, #tpu.memory_space<vmem>>, %arg5: memref<1x8x128xf32, #tpu.memory_space<vmem>>) attributes {dimension_semantics = [#tpu.dimension_semantics<parallel>, #tpu.dimension_semantics<arbitrary>], iteration_bounds = array<i64: 2, 1>, scalar_prefetch = 0 : i64, scratch_operands = 0 : i64, tpu.core_type = #tpu.core_type<tc>, window_params = [{transform_indices = @transform_0, window_bounds = array<i64: 8, 128>}, {transform_indices = @transform_1, window_bounds = array<i64: 8, 128>}, {transform_indices = @transform_2, window_bounds = array<i64: 1, 8, 128>}, {transform_indices = @transform_3, window_bounds = array<i64: 1, 8, 128>}]} {
    %c0_i32 = arith.constant 0 : i32
    %0 = arith.cmpi eq, %arg1, %c0_i32 : i32
    %1 = arith.extui %0 : i1 to i32
    %c0_i32_0 = arith.constant 0 : i32
    %2 = arith.cmpi ne, %1, %c0_i32_0 : i32
    scf.if %2 {
      %cst_26 = arith.constant 0.000000e+00 : f32
      %42 = vector.broadcast %cst_26 : f32 to vector<1x8x128xf32>
      %c0_27 = arith.constant 0 : index
      %c0_28 = arith.constant 0 : index
      %c0_29 = arith.constant 0 : index
      %43 = vector.load %arg4[%c0_27, %c0_28, %c0_29] : memref<1x8x128xf32, #tpu.memory_space<vmem>>, vector<1x8x128xf32>
      tpu.vector_store %arg4[%c0_27, %c0_28, %c0_29], %42 {strides = array<i32>} : memref<1x8x128xf32, #tpu.memory_space<vmem>>, vector<1x8x128xf32>,
      %cst_30 = arith.constant 0.000000e+00 : f32
      %44 = vector.broadcast %cst_30 : f32 to vector<1x8x128xf32>
      %c0_31 = arith.constant 0 : index
      %c0_32 = arith.constant 0 : index
      %c0_33 = arith.constant 0 : index
      %45 = vector.load %arg5[%c0_31, %c0_32, %c0_33] : memref<1x8x128xf32, #tpu.memory_space<vmem>>, vector<1x8x128xf32>
      tpu.vector_store %arg5[%c0_31, %c0_32, %c0_33], %44 {strides = array<i32>} : memref<1x8x128xf32, #tpu.memory_space<vmem>>, vector<1x8x128xf32>,
    } else {
    }
    %c0 = arith.constant 0 : index
    %c0_1 = arith.constant 0 : index
    %3 = vector.load %arg2[%c0, %c0_1] : memref<8x128xf32, #tpu.memory_space<vmem>>, vector<8x128xf32>
    %c0_2 = arith.constant 0 : index
    %c0_3 = arith.constant 0 : index
    %4 = vector.load %arg3[%c0_2, %c0_3] : memref<8x128xf32, #tpu.memory_space<vmem>>, vector<8x128xf32>
    %cst = arith.constant 1.000000e+00 : f32
    %5 = vector.broadcast %cst : f32 to vector<8x128xf32>
    %6 = arith.cmpf oeq, %4, %5 : vector<8x128xf32>
    %cst_4 = arith.constant 2.500000e-01 : f32
    %cst_5 = arith.constant 7.500000e-01 : f32
    %7 = vector.broadcast %cst_4 : f32 to vector<8x128xf32>
    %8 = vector.broadcast %cst_5 : f32 to vector<8x128xf32>
    %9 = arith.select %6, %7, %8 : vector<8x128xi1>, vector<8x128xf32>
    %cst_6 = arith.constant 1.000000e+00 : f32
    %10 = vector.broadcast %cst_6 : f32 to vector<8x128xf32>
    %11 = arith.subf %10, %3 : vector<8x128xf32>
    %12 = arith.select %6, %11, %3 : vector<8x128xi1>, vector<8x128xf32>
    %13 = arith.mulf %12, %12 : vector<8x128xf32>
    %14 = arith.mulf %9, %13 : vector<8x128xf32>
    %15 = math.log %3 : vector<8x128xf32>
    %cst_7 = arith.constant -1.000000e+02 : f32
    %16 = vector.broadcast %cst_7 : f32 to vector<8x128xf32>
    %17 = arith.maximumf %15, %16 : vector<8x128xf32>
    %cst_8 = arith.constant 1.000000e+00 : f32
    %18 = vector.broadcast %cst_8 : f32 to vector<8x128xf32>
    %19 = arith.subf %18, %3 : vector<8x128xf32>
    %20 = math.log %19 : vector<8x128xf32>
    %cst_9 = arith.constant -1.000000e+02 : f32
    %21 = vector.broadcast %cst_9 : f32 to vector<8x128xf32>
    %22 = arith.maximumf %20, %21 : vector<8x128xf32>
    %23 = arith.mulf %4, %17 : vector<8x128xf32>
    %cst_10 = arith.constant 1.000000e+00 : f32
    %24 = vector.broadcast %cst_10 : f32 to vector<8x128xf32>
    %25 = arith.subf %24, %4 : vector<8x128xf32>
    %26 = arith.mulf %25, %22 : vector<8x128xf32>
    %27 = arith.addf %23, %26 : vector<8x128xf32>
    %cst_11 = arith.constant 0.000000e+00 : f32
    %28 = vector.broadcast %cst_11 : f32 to vector<8x128xf32>
    %29 = arith.subf %28, %27 : vector<8x128xf32>
    %30 = vector.shape_cast %14 : vector<8x128xf32> to vector<1x8x128xf32>
    %cst_12 = arith.constant dense<0.000000e+00> : vector<8x128xf32>
    %31 = vector.multi_reduction <add>, %30, %cst_12 [0] : vector<1x8x128xf32> to vector<8x128xf32>
    %32 = vector.shape_cast %29 : vector<8x128xf32> to vector<1x8x128xf32>
    %cst_13 = arith.constant dense<0.000000e+00> : vector<8x128xf32>
    %33 = vector.multi_reduction <add>, %32, %cst_13 [0] : vector<1x8x128xf32> to vector<8x128xf32>
    %c0_14 = arith.constant 0 : index
    %c0_15 = arith.constant 0 : index
    %c0_16 = arith.constant 0 : index
    %34 = vector.load %arg4[%c0_14, %c0_15, %c0_16] : memref<1x8x128xf32, #tpu.memory_space<vmem>>, vector<1x8x128xf32>
    %35 = vector.shape_cast %31 : vector<8x128xf32> to vector<1x8x128xf32>
    %36 = arith.addf %34, %35 : vector<1x8x128xf32>
    %c0_17 = arith.constant 0 : index
    %c0_18 = arith.constant 0 : index
    %c0_19 = arith.constant 0 : index
    %37 = vector.load %arg4[%c0_17, %c0_18, %c0_19] : memref<1x8x128xf32, #tpu.memory_space<vmem>>, vector<1x8x128xf32>
    tpu.vector_store %arg4[%c0_17, %c0_18, %c0_19], %36 {strides = array<i32>} : memref<1x8x128xf32, #tpu.memory_space<vmem>>, vector<1x8x128xf32>,
    %c0_20 = arith.constant 0 : index
    %c0_21 = arith.constant 0 : index
    %c0_22 = arith.constant 0 : index
    %38 = vector.load %arg5[%c0_20, %c0_21, %c0_22] : memref<1x8x128xf32, #tpu.memory_space<vmem>>, vector<1x8x128xf32>
    %39 = vector.shape_cast %33 : vector<8x128xf32> to vector<1x8x128xf32>
    %40 = arith.addf %38, %39 : vector<1x8x128xf32>
    %c0_23 = arith.constant 0 : index
    %c0_24 = arith.constant 0 : index
    %c0_25 = arith.constant 0 : index
    %41 = vector.load %arg5[%c0_23, %c0_24, %c0_25] : memref<1x8x128xf32, #tpu.memory_space<vmem>>, vector<1x8x128xf32>
    tpu.vector_store %arg5[%c0_23, %c0_24, %c0_25], %40 {strides = array<i32>} : memref<1x8x128xf32, #tpu.memory_space<vmem>>, vector<1x8x128xf32>,
    return
  }
  func.func @transform_0(%arg0: i32, %arg1: i32) -> (i32, i32) {
    %c1_i32 = arith.constant 1 : i32
    %0 = arith.muli %arg0, %c1_i32 : i32
    %1 = arith.addi %0, %arg1 : i32
    %c0_i32 = arith.constant 0 : i32
    %c0_i32_0 = arith.constant 0 : i32
    return %1, %c0_i32 : i32, i32
  }
  func.func @transform_1(%arg0: i32, %arg1: i32) -> (i32, i32) {
    %c1_i32 = arith.constant 1 : i32
    %0 = arith.muli %arg0, %c1_i32 : i32
    %1 = arith.addi %0, %arg1 : i32
    %c0_i32 = arith.constant 0 : i32
    %c0_i32_0 = arith.constant 0 : i32
    return %1, %c0_i32 : i32, i32
  }
  func.func @transform_2(%arg0: i32, %arg1: i32) -> (i32, i32, i32) {
    %c0_i32 = arith.constant 0 : i32
    %c0_i32_0 = arith.constant 0 : i32
    %c0_i32_1 = arith.constant 0 : i32
    return %arg0, %c0_i32, %c0_i32_0 : i32, i32, i32
  }
  func.func @transform_3(%arg0: i32, %arg1: i32) -> (i32, i32, i32) {
    %c0_i32 = arith.constant 0 : i32
    %c0_i32_0 = arith.constant 0 : i32
    %c0_i32_1 = arith.constant 0 : i32
    return %arg0, %c0_i32, %c0_i32_0 : i32, i32, i32
  }
}

</mosaic_0001>

<llo_original>
// kernel: tpu_custom_call.1
$region0: #{tpu_custom_call.1}
  #allocation0 [shape = 'u32[]', space=smem, size = 0x4, offset = 0x4, fixed_abs, tag = 'smem constant byte address 0x4 - core index']
  #allocation1 [shape = 'u32[144,128]{1,0:T(1,128)}', space=vmem, size = 0x12000, scoped, tag = 'internal scratch']
  %s0 = inlined_call_operand.hbm [shape: f32[16,128], index: 0, kind: input, shape index: {}]
  %s1 = inlined_call_operand.hbm [shape: f32[16,128], index: 1, kind: input, shape index: {}]
  %s2 = inlined_call_operand.hbm [shape: f32[2,8,128], index: 2, kind: output, shape index: {0}]
  %s3 = inlined_call_operand.hbm [shape: f32[2,8,128], index: 3, kind: output, shape index: {1}]
  %4 = xla_tuple %s2, %s3
  %s5 = sld [smem:[#allocation0]]
  $region61: #{tpu_custom_call.1} parent=0
    _
  %s7 = ssub.s32 1, %s5
  %s8 = scalar_select 0, %s7, %s5
  $region1: #{tpu_custom_call.1} parent=0
    #allocation2 [shape = 'u8[8192]{0}', space=vmem, size = 0x2000, scoped, tag = 'input window, operand 0']
    #allocation3 [shape = 's32[2]{0}', space=sflag, size = 0x8, scoped, tag = 'scoped memory for tpu_custom_call.1']
    #allocation4 [shape = 's32[2]{0}', space=sflag, size = 0x8, scoped, tag = 'scoped memory for tpu_custom_call.1']
    #allocation5 [shape = 'u8[8192]{0}', space=vmem, size = 0x2000, scoped, tag = 'input window, operand 1']
    #allocation6 [shape = 's32[2]{0}', space=sflag, size = 0x8, scoped, tag = 'scoped memory for tpu_custom_call.1']
    #allocation7 [shape = 'u8[8192]{0}', space=vmem, size = 0x2000, scoped, tag = 'output window, operand 0']
    #allocation8 [shape = 'u8[8192]{0}', space=vmem, size = 0x2000, scoped, tag = 'output window, operand 1']
    #allocation9 [shape = 's32[2]{0}', space=sflag, size = 0x8, scoped, tag = 'scoped memory for tpu_custom_call.1']
    %9 = vsyncpa [#allocation3], 0
    %s10 = scalar_lea.sflag [#allocation3], 1
    %11 = vsyncpa %s10, 0
    %12 = vsyncpa [#allocation6], 0
    %s13 = scalar_lea.sflag [#allocation6], 1
    %14 = vsyncpa %s13, 0
    %15 = vsyncpa [#allocation4], 0
    %s16 = scalar_lea.sflag [#allocation4], 1
    %17 = vsyncpa %s16, 0
    %18 = vsyncpa [#allocation9], 0
    %s19 = scalar_lea.sflag [#allocation9], 1
    %20 = vsyncpa %s19, 0
    loop: start=0, step=1, limit=4
    $region2: #{tpu_custom_call.1} parent=1 // loop_pre_header
      _
    $region3: #{tpu_custom_call.1} parent=1 // loop_header
      %s22 = sphi 0, %s26
      %p23 = scmp.ge.s32.totalorder %s22, 4
      %s29 = sphi 0, %s41
      %s30 = sphi 0, %s37
      %s31 = sphi 0, %s29
      %s32 = sphi 0, %s30
      %s33 = sphi 0, %s31
      %s34 = sphi 0, %s32
      %s46 = sphi 0, %s48
      %s49 = sphi 0, %s46
      %s50 = sphi 0, %s49
      %s66 = sphi 0, %s50
      %s74 = sphi 0, %s76
      %s77 = sphi 0, %s74
      %s78 = sphi 0, %s77
      %s94 = sphi 0, %s78
      %s100 = sphi 0, %s102
      %s103 = sphi 0, %s100
      %s104 = sphi 0, %s103
      %s120 = sphi 0, %s104
      %s126 = sphi 0, %s128
      %s129 = sphi 0, %s126
      %s130 = sphi 0, %s129
      %s146 = sphi 0, %s130
    $region4: #{tpu_custom_call.1} parent=1 // loop_header_branch
      %25 = sbr.rel (%p23) target = $region8
    $region5: #{tpu_custom_call.1} parent=1 // loop_body
      %s27 = ssub.s32 %s22, 1
      %s28 = ssub.s32 %s22, 2
      %s35 = sadd.s32 1, %s30
      %p36 = scmp.ge.s32.totalorder %s35, 1
      %s37 = scalar_select %p36, 0, %s35
      %s38 = sadd.s32 1, %s29
      %s39 = scalar_select %p36, %s38, %s29
      %p40 = scmp.ge.s32.totalorder %s39, 2
      %s41 = scalar_select %p40, 0, %s39
      %s42 = sadd.s32 %s29, %s30
      %s43 = sadd.s32 %s41, %s37
      %s44 = ssub.s32 %s42, %s43
      %p45 = scmp.eq.s32.totalorder %s44, 0
      %s47 = sadd.s32 %s46, 1
      %s48 = scalar_select %p45, %s46, %s47
      %p51 = pneg %p45
      %p52 = scmp.eq.s32.totalorder %s22, 1
      %p53 = por %p51, %p52
      %p54 = scmp.ne.s32.totalorder %s46, %s49
      %p55 = scmp.eq.s32.totalorder %s22, 0
      %p56 = por %p54, %p55
      %p57 = scmp.ne.s32.totalorder %s46, %s49
      %p58 = scmp.eq.s32.totalorder %s27, 1
      %p59 = por %p57, %p58
      %p60 = scmp.ne.s32.totalorder %s49, %s50
      %p61 = scmp.eq.s32.totalorder %s27, 0
      %p62 = por %p60, %p61
      %p63 = scmp.ne.s32.totalorder %s49, %s50
      %p64 = scmp.eq.s32.totalorder %s28, 1
      %p65 = por %p63, %p64
      %p67 = scmp.ne.s32.totalorder %s50, %s66
      %p68 = scmp.eq.s32.totalorder %s28, 0
      %p69 = por %p67, %p68
      %s70 = sadd.s32 %s29, %s30
      %s71 = sadd.s32 %s41, %s37
      %s72 = ssub.s32 %s70, %s71
      %p73 = scmp.eq.s32.totalorder %s72, 0
      %s75 = sadd.s32 %s74, 1
      %s76 = scalar_select %p73, %s74, %s75
      %p79 = pneg %p73
      %p80 = scmp.eq.s32.totalorder %s22, 1
      %p81 = por %p79, %p80
      %p82 = scmp.ne.s32.totalorder %s74, %s77
      %p83 = scmp.eq.s32.totalorder %s22, 0
      %p84 = por %p82, %p83
      %p85 = scmp.ne.s32.totalorder %s74, %s77
      %p86 = scmp.eq.s32.totalorder %s27, 1
      %p87 = por %p85, %p86
      %p88 = scmp.ne.s32.totalorder %s77, %s78
      %p89 = scmp.eq.s32.totalorder %s27, 0
      %p90 = por %p88, %p89
      %p91 = scmp.ne.s32.totalorder %s77, %s78
      %p92 = scmp.eq.s32.totalorder %s28, 1
      %p93 = por %p91, %p92
      %p95 = scmp.ne.s32.totalorder %s78, %s94
      %p96 = scmp.eq.s32.totalorder %s28, 0
      %p97 = por %p95, %p96
      %s98 = ssub.s32 %s29, %s41
      %p99 = scmp.eq.s32.totalorder %s98, 0
      %s101 = sadd.s32 %s100, 1
      %s102 = scalar_select %p99, %s100, %s101
      %p105 = pneg %p99
      %p106 = scmp.eq.s32.totalorder %s22, 1
      %p107 = por %p105, %p106
      %p108 = scmp.ne.s32.totalorder %s100, %s103
      %p109 = scmp.eq.s32.totalorder %s22, 0
      %p110 = por %p108, %p109
      %p111 = scmp.ne.s32.totalorder %s100, %s103
      %p112 = scmp.eq.s32.totalorder %s27, 1
      %p113 = por %p111, %p112
      %p114 = scmp.ne.s32.totalorder %s103, %s104
      %p115 = scmp.eq.s32.totalorder %s27, 0
      %p116 = por %p114, %p115
      %p117 = scmp.ne.s32.totalorder %s103, %s104
      %p118 = scmp.eq.s32.totalorder %s28, 1
      %p119 = por %p117, %p118
      %p121 = scmp.ne.s32.totalorder %s104, %s120
      %p122 = scmp.eq.s32.totalorder %s28, 0
      %p123 = por %p121, %p122
      %s124 = ssub.s32 %s29, %s41
      %p125 = scmp.eq.s32.totalorder %s124, 0
      %s127 = sadd.s32 %s126, 1
      %s128 = scalar_select %p125, %s126, %s127
      %p131 = pneg %p125
      %p132 = scmp.eq.s32.totalorder %s22, 1
      %p133 = por %p131, %p132
      %p134 = scmp.ne.s32.totalorder %s126, %s129
      %p135 = scmp.eq.s32.totalorder %s22, 0
      %p136 = por %p134, %p135
      %p137 = scmp.ne.s32.totalorder %s126, %s129
      %p138 = scmp.eq.s32.totalorder %s27, 1
      %p139 = por %p137, %p138
      %p140 = scmp.ne.s32.totalorder %s129, %s130
      %p141 = scmp.eq.s32.totalorder %s27, 0
      %p142 = por %p140, %p141
      %p143 = scmp.ne.s32.totalorder %s129, %s130
      %p144 = scmp.eq.s32.totalorder %s28, 1
      %p145 = por %p143, %p144
      %p147 = scmp.ne.s32.totalorder %s130, %s146
      %p148 = scmp.eq.s32.totalorder %s28, 0
      %p149 = por %p147, %p148
      %p150 = scmp.le.s32.totalorder 1, %s22
      %p151 = scmp.lt.s32.totalorder %s22, 3
      %p152 = pnand %p150, %p151
      %p153 = pneg %p152
      // Predicated region
      $region9: #{tpu_custom_call.1} parent=5 // pred_check
        _
      $region10: #{tpu_custom_call.1} parent=5 // pred_check_branch
        %155 = sbr.rel (%p152) target = $region12
      $region11: #{tpu_custom_call.1} parent=5 // pred_region
        %s156 = ssub.s32 %s22, 1
      $region12: #{tpu_custom_call.1} parent=5 // pred_fallthru
        _
      %p157 = scmp.lt.s32.totalorder %s22, 2
      // Predicated region
      $region13: #{tpu_custom_call.1} parent=5 // pred_check
        %p158 = pneg %p157
      $region14: #{tpu_custom_call.1} parent=5 // pred_check_branch
        %160 = sbr.rel (%p158) target = $region16
      $region15: #{tpu_custom_call.1} parent=5 // pred_region
        // Predicated region
        $region17: #{tpu_custom_call.1} parent=15 // pred_check
          %p161 = pneg %p56
        $region18: #{tpu_custom_call.1} parent=15 // pred_check_branch
          %163 = sbr.rel (%p161) target = $region20
        $region19: #{tpu_custom_call.1} parent=15 // pred_region
          %s164 = sand.u32 %s46, 1
          %s165 = scalar_lea.sflag [#allocation3], %s164
          %s166 = sand.u32 %s46, 1
          %s167 = smul.addr %s166, 8
          %s168 = scalar_lea.vmem [#allocation2], %s167
          %s169 = sadd.s32 %s29, %s30
          %s171 = ssub.s32 128, 128
          %172 = vsyncadd %s165, %s171
          %s173 = smul.addr %s169, 128
          %s174 = scalar_lea.hbm %s0, %s173
          %s176 = sshll.u32 %s168, 4
          %s177 = int_to_ptr.vmem [resolvable:$true] %s176
          %179 = dma.hbm_to_vmem [thread:$0]  %s174, 128, %s177, %s165
        $region20: #{tpu_custom_call.1} parent=15 // pred_fallthru
          _
        // Predicated region
        $region21: #{tpu_custom_call.1} parent=15 // pred_check
          %p180 = pneg %p84
        $region22: #{tpu_custom_call.1} parent=15 // pred_check_branch
          %182 = sbr.rel (%p180) target = $region24
        $region23: #{tpu_custom_call.1} parent=15 // pred_region
          %s183 = sand.u32 %s74, 1
          %s184 = scalar_lea.sflag [#allocation6], %s183
          %s185 = sand.u32 %s74, 1
          %s186 = smul.addr %s185, 8
          %s187 = scalar_lea.vmem [#allocation5], %s186
          %s188 = sadd.s32 %s29, %s30
          %s190 = ssub.s32 128, 128
          %191 = vsyncadd %s184, %s190
          %s192 = smul.addr %s188, 128
          %s193 = scalar_lea.hbm %s1, %s192
          %s195 = sshll.u32 %s187, 4
          %s196 = int_to_ptr.vmem [resolvable:$true] %s195
          %198 = dma.hbm_to_vmem [thread:$0]  %s193, 128, %s196, %s184
        $region24: #{tpu_custom_call.1} parent=15 // pred_fallthru
          _
      $region16: #{tpu_custom_call.1} parent=5 // pred_fallthru
        _
      %p199 = scmp.le.s32.totalorder 1, %s22
      %p200 = scmp.lt.s32.totalorder %s22, 3
      %p201 = pnand %p199, %p200
      %p202 = pneg %p201
      // Predicated region
      $region25: #{tpu_custom_call.1} parent=5 // pred_check
        _
      $region26: #{tpu_custom_call.1} parent=5 // pred_check_branch
        %204 = sbr.rel (%p201) target = $region28
      $region27: #{tpu_custom_call.1} parent=5 // pred_region
        %s205 = ssub.s32 %s22, 1
        %s206 = sand.u32 %s49, 1
        %s207 = scalar_lea.sflag [#allocation3], %s206
        %s208 = sand.u32 %s49, 1
        %s209 = smul.addr %s208, 8
        %s210 = scalar_lea.vmem [#allocation2], %s209
        // Predicated region
        $region29: #{tpu_custom_call.1} parent=27 // pred_check
          %p211 = pneg %p62
        $region30: #{tpu_custom_call.1} parent=27 // pred_check_branch
          %213 = sbr.rel (%p211) target = $region32
        $region31: #{tpu_custom_call.1} parent=27 // pred_region
          %214 = dma.done %s207, 128
        $region32: #{tpu_custom_call.1} parent=27 // pred_fallthru
          _
        %s215 = sand.u32 %s77, 1
        %s216 = scalar_lea.sflag [#allocation6], %s215
        %s217 = sand.u32 %s77, 1
        %s218 = smul.addr %s217, 8
        %s219 = scalar_lea.vmem [#allocation5], %s218
        // Predicated region
        $region33: #{tpu_custom_call.1} parent=27 // pred_check
          %p220 = pneg %p90
        $region34: #{tpu_custom_call.1} parent=27 // pred_check_branch
          %222 = sbr.rel (%p220) target = $region36
        $region35: #{tpu_custom_call.1} parent=27 // pred_region
          %223 = dma.done %s216, 128
        $region36: #{tpu_custom_call.1} parent=27 // pred_fallthru
          _
        %s224 = sand.u32 %s49, 1
        %s225 = scalar_lea.sflag [#allocation3], %s224
        %s226 = sand.u32 %s49, 1
        %s227 = smul.addr %s226, 8
        %s228 = scalar_lea.vmem [#allocation2], %s227
        %p229 = pneg %p62
        %p230 = pneg %p59
        %s231 = sand.u32 %s77, 1
        %s232 = scalar_lea.sflag [#allocation6], %s231
        %s233 = sand.u32 %s77, 1
        %s234 = smul.addr %s233, 8
        %s235 = scalar_lea.vmem [#allocation5], %s234
        %p236 = pneg %p90
        %p237 = pneg %p87
        %p238 = pneg %p116
        %p239 = pneg %p113
        %s240 = sand.u32 %s103, 1
        %s241 = scalar_lea.sflag [#allocation4], %s240
        %s242 = sand.u32 %s103, 1
        %s243 = smul.addr %s242, 8
        %s244 = scalar_lea.vmem [#allocation7], %s243
        %p245 = pneg %p142
        %p246 = pneg %p139
        %s247 = sand.u32 %s129, 1
        %s248 = scalar_lea.sflag [#allocation9], %s247
        %s249 = sand.u32 %s129, 1
        %s250 = smul.addr %s249, 8
        %s251 = scalar_lea.vmem [#allocation8], %s250
        %s252 = sadd.s32 %s31, %s32
        %s253 = sadd.s32 %s31, %s32
        %p254 = scmp.eq.s32.totalorder %s32, 0
        // Predicated region
        $region37: #{tpu_custom_call.1} parent=27 // pred_check
          %p255 = pneg %p254
        $region38: #{tpu_custom_call.1} parent=27 // pred_check_branch
          %257 = sbr.rel (%p255) target = $region40
        $region39: #{tpu_custom_call.1} parent=27 // pred_region
          %258 = vst [vmem:[%s244] sm:$0xff] 0.0
          %259 = vst [vmem:[%s251] sm:$0xff] 0.0
        $region40: #{tpu_custom_call.1} parent=27 // pred_fallthru
          _
        %v260 = vld [vmem:[%s210] sm:$0xff]
        %v261 = vld [vmem:[%s219] sm:$0xff]
        %vm262 = vcmp.eq.f32.partialorder %v261, 1.0
        %v263 = vsel %vm262, 0.25, 0.75
        %v264 = vsub.f32 1.0, %v260
        %v265 = vsel %vm262, %v264, %v260
        %v266 = vmul.f32 %v265, %v265
        %v267 = vmul.f32 %v263, %v266
        %v268 = vlog2.pop %v260
        %v269 = vmul.f32 %v268, 0.6931472
        %v270 = vmax.f32 %v269, -100.0
        %v271 = vlog2.pop %v264
        %v272 = vmul.f32 %v271, 0.6931472
        %v273 = vmax.f32 %v272, -100.0
        %v274 = vmul.f32 %v261, %v270
        %v275 = vsub.f32 1.0, %v261
        %v276 = vmul.f32 %v275, %v273
        %v277 = vadd.f32 %v274, %v276
        %v278 = vsub.f32 0.0, %v277
        %v279 = vadd.f32 %v267, 0.0
        %v280 = vadd.f32 %v278, 0.0
        %v281 = vld [vmem:[%s244] sm:$0xff]
        %v282 = vadd.f32 %v281, %v279
        %283 = vst [vmem:[%s244] sm:$0xff] %v282
        %v284 = vld [vmem:[%s251] sm:$0xff]
        %v285 = vadd.f32 %v284, %v280
        %286 = vst [vmem:[%s251] sm:$0xff] %v285
        %s287 = sand.u32 %s103, 1
        %s288 = scalar_lea.sflag [#allocation4], %s287
        %s289 = sand.u32 %s103, 1
        %s290 = smul.addr %s289, 8
        %s291 = scalar_lea.vmem [#allocation7], %s290
        %s292 = sand.u32 %s129, 1
        %s293 = scalar_lea.sflag [#allocation9], %s292
        %s294 = sand.u32 %s129, 1
        %s295 = smul.addr %s294, 8
        %s296 = scalar_lea.vmem [#allocation8], %s295
        // Predicated region
        $region41: #{tpu_custom_call.1} parent=27 // pred_check
          %p297 = pneg %p113
        $region42: #{tpu_custom_call.1} parent=27 // pred_check_branch
          %299 = sbr.rel (%p297) target = $region44
        $region43: #{tpu_custom_call.1} parent=27 // pred_region
          %s301 = ssub.s32 128, 128
          %302 = vsyncadd %s288, %s301
          %s303 = smul.addr %s31, 128
          %s304 = scalar_lea.hbm %s2, %s303
          %s306 = sshll.u32 %s291, 4
          %s307 = int_to_ptr.vmem [resolvable:$true] %s306
          %309 = dma.vmem_to_hbm [thread:$0]  %s307, 128, %s304, %s288
        $region44: #{tpu_custom_call.1} parent=27 // pred_fallthru
          _
        // Predicated region
        $region45: #{tpu_custom_call.1} parent=27 // pred_check
          %p310 = pneg %p139
        $region46: #{tpu_custom_call.1} parent=27 // pred_check_branch
          %312 = sbr.rel (%p310) target = $region48
        $region47: #{tpu_custom_call.1} parent=27 // pred_region
          %s314 = ssub.s32 128, 128
          %315 = vsyncadd %s293, %s314
          %s316 = smul.addr %s31, 128
          %s317 = scalar_lea.hbm %s3, %s316
          %s319 = sshll.u32 %s296, 4
          %s320 = int_to_ptr.vmem [resolvable:$true] %s319
          %322 = dma.vmem_to_hbm [thread:$0]  %s320, 128, %s317, %s293
        $region48: #{tpu_custom_call.1} parent=27 // pred_fallthru
          _
      $region28: #{tpu_custom_call.1} parent=5 // pred_fallthru
        _
      %p323 = scmp.le.s32.totalorder 2, %s22
      // Predicated region
      $region49: #{tpu_custom_call.1} parent=5 // pred_check
        %p324 = pneg %p323
      $region50: #{tpu_custom_call.1} parent=5 // pred_check_branch
        %326 = sbr.rel (%p324) target = $region52
      $region51: #{tpu_custom_call.1} parent=5 // pred_region
        %s327 = ssub.s32 %s22, 2
        // Predicated region
        $region53: #{tpu_custom_call.1} parent=51 // pred_check
          %p328 = pneg %p119
        $region54: #{tpu_custom_call.1} parent=51 // pred_check_branch
          %330 = sbr.rel (%p328) target = $region56
        $region55: #{tpu_custom_call.1} parent=51 // pred_region
          %s331 = sand.u32 %s104, 1
          %s332 = scalar_lea.sflag [#allocation4], %s331
          %s333 = sand.u32 %s104, 1
          %s334 = smul.addr %s333, 8
          %s335 = scalar_lea.vmem [#allocation7], %s334
          %336 = dma.done %s332, 128
        $region56: #{tpu_custom_call.1} parent=51 // pred_fallthru
          _
        // Predicated region
        $region57: #{tpu_custom_call.1} parent=51 // pred_check
          %p337 = pneg %p145
        $region58: #{tpu_custom_call.1} parent=51 // pred_check_branch
          %339 = sbr.rel (%p337) target = $region60
        $region59: #{tpu_custom_call.1} parent=51 // pred_region
          %s340 = sand.u32 %s130, 1
          %s341 = scalar_lea.sflag [#allocation9], %s340
          %s342 = sand.u32 %s130, 1
          %s343 = smul.addr %s342, 8
          %s344 = scalar_lea.vmem [#allocation8], %s343
          %345 = dma.done %s341, 128
        $region60: #{tpu_custom_call.1} parent=51 // pred_fallthru
          _
      $region52: #{tpu_custom_call.1} parent=5 // pred_fallthru
        _
    $region6: #{tpu_custom_call.1} parent=1 // loop_footer
      %s26 = sadd.s32 1, %s22
    $region7: #{tpu_custom_call.1} parent=1 // loop_footer_branch
      %21 = sbr.rel target = $region3
    $region8: #{tpu_custom_call.1} parent=1 // loop_exit
      _
    %346 = vsyncpa [#allocation3], 1
    %s347 = scalar_lea.sflag [#allocation3], 1
    %348 = vsyncpa %s347, 1
    %349 = vsyncpa [#allocation6], 1
    %s350 = scalar_lea.sflag [#allocation6], 1
    %351 = vsyncpa %s350, 1
    %352 = vsyncpa [#allocation4], 1
    %s353 = scalar_lea.sflag [#allocation4], 1
    %354 = vsyncpa %s353, 1
    %355 = vsyncpa [#allocation9], 1
    %s356 = scalar_lea.sflag [#allocation9], 1
    %357 = vsyncpa %s356, 1

</llo_original>
